<compile_context>
chip_gen: v7x
topology: tpu7x:2x2x1
jax: 0.10.0
libtpu: 0.0.40
codegen_flags: <defaults>
</compile_context>

<pallas_src>
import functools

import jax
import jax.numpy as jnp
import numpy as np
from jax.experimental import pallas as pl
from jax.experimental.pallas import tpu as pltpu


def _ce_kernel(logits_ref, labels_ref, out_ref, m_ref, l_ref, lab_ref,
               *, n_rows, n_cols, tile_n, tile_v):
    """Online log-sum-exp cross entropy (ignore_index = -1).

    Grid = (row tiles [parallel], vocab tiles [arbitrary, innermost]).
    Scratch (per row tile, reset at v==0): running max m, running sum-exp l,
    accumulated label logit. On the last vocab tile the per-row losses are
    masked (ignore_index and ragged-row tail) and reduced; each row tile
    writes its partial (sum, count) into its own lane-dense (8, 128) block.
    """
    i = pl.program_id(0)          # row tile
    v = pl.program_id(1)          # vocab tile (reduction axis, innermost)
    nv = pl.num_programs(1)

    @pl.when(v == 0)
    def _init():
        m_ref[...] = jnp.full_like(m_ref, -jnp.inf)
        l_ref[...] = jnp.zeros_like(l_ref)
        lab_ref[...] = jnp.zeros_like(lab_ref)

    labels = labels_ref[...]                                     # (tile_n, 1) int32
    # Local (per-tile) column index compared against labels shifted into tile
    # coordinates: avoids a full-tile "+ v*tile_v" add per element.
    col_local = jax.lax.broadcasted_iota(jnp.int32, (tile_n, tile_v), 1)
    labels_local = labels - v * tile_v                           # (tile_n, 1), cheap

    def _update(mask_tail):
        raw = logits_ref[...]                                    # native dtype (bf16/f32)
        if mask_tail:
            tail = n_cols - (nv - 1) * tile_v                    # static python int >= 1
            raw = jnp.where(col_local < tail, raw,
                            jnp.asarray(-jnp.inf, dtype=raw.dtype))
        # max is exact in the native dtype; the tile is cast to f32 exactly once below.
        block_max = jnp.max(raw, axis=-1, keepdims=True).astype(jnp.float32)
        m_old = m_ref[...]
        m_new = jnp.maximum(m_old, block_max)
        shifted = raw.astype(jnp.float32) - m_new                # reused by exp AND select
        l_ref[...] = (jnp.exp(m_old - m_new) * l_ref[...]
                      + jnp.sum(jnp.exp(shifted), axis=-1, keepdims=True))
        m_ref[...] = m_new
        # Accumulate the raw label logit: select the *shifted* value at the label's
        # local column, then add m_new back for rows whose label lies in this tile
        # (a per-row op), so the result equals the raw logit at the label.
        sel = jnp.sum(jnp.where(col_local == labels_local, shifted, 0.0),
                      axis=-1, keepdims=True)
        hit = jnp.logical_and(labels_local >= 0, labels_local < tile_v)
        lab_ref[...] += sel + jnp.where(hit, m_new, 0.0)

    if n_cols % tile_v != 0:       # static: only when V has a ragged tail
        @pl.when(v == nv - 1)      # tail mask only on the last vocab tile
        def _last():
            _update(True)

        @pl.when(v != nv - 1)
        def _not_last():
            _update(False)
    else:
        _update(False)

    @pl.when(v == nv - 1)
    def _finalize():
        lse = m_ref[...] + jnp.log(l_ref[...])                   # (tile_n, 1)
        loss = lse - lab_ref[...]                                # per-row CE
        valid = labels != -1                                     # ignore_index = -1
        if n_rows % tile_n != 0:                                 # static: ragged row tail
            row = i * tile_n + jax.lax.broadcasted_iota(jnp.int32, (tile_n, 1), 0)
            valid = jnp.logical_and(valid, row < n_rows)
        # NOTE: keep the *select* form: garbage rows past n_rows may hold NaN/Inf logits;
        # `loss * valid` would propagate them into the partial sums.
        loss = jnp.where(valid, loss, 0.0)
        loss_sum = jnp.sum(loss)
        cnt = jnp.sum(valid.astype(jnp.float32))

        # write this row tile's partial into its own (8,128) block:
        # [0,0] = sum of losses, [0,1] = number of valid rows, rest zeros.
        r = jax.lax.broadcasted_iota(jnp.int32, (8, 128), 0)
        c = jax.lax.broadcasted_iota(jnp.int32, (8, 128), 1)
        out_ref[...] = jnp.where((r == 0) & (c == 0), loss_sum,
                                 jnp.where((r == 0) & (c == 1), cnt, 0.0))


def _cross_entropy_sum_count(logits, labels):
    """logits: (N, V) float (any dtype), labels: (N,) int. Returns (sum_loss, count)."""
    N, V = logits.shape
    labels = labels.astype(jnp.int32).reshape(N, 1)

    # vocab tile: full V when small, else 2048 (multiple of 128) with last-tile masking
    tile_v = V if V <= 2048 else 2048

    # row tile: ~4 MiB of logits per grid step (>=10x the ~0.35us per-step overhead even
    # at v7x's 3.2 TB/s HBM), multiple of 8, never (much) more than N.
    itemsize = logits.dtype.itemsize
    rows = max(8, (4 << 20) // (tile_v * itemsize))
    rows = (rows // 8) * 8
    n_cap = ((N + 7) // 8) * 8
    tile_n = min(rows, n_cap)

    # keep >= ~8 row tiles when N allows, so the "parallel" row axis load-balances across
    # both v7x TensorCores instead of serializing onto one core.
    min_row_tiles = 8
    if N >= min_row_tiles * 8:
        per_tile = -(-N // min_row_tiles)            # ceil(N / min_row_tiles)
        per_tile = ((per_tile + 7) // 8) * 8         # round up to a multiple of 8
        tile_n = max(8, min(tile_n, per_tile))

    num_row_tiles = (N + tile_n - 1) // tile_n
    num_v_tiles = (V + tile_v - 1) // tile_v

    kernel = functools.partial(_ce_kernel, n_rows=N, n_cols=V,
                               tile_n=tile_n, tile_v=tile_v)

    partials = pl.pallas_call(
        kernel,
        out_shape=jax.ShapeDtypeStruct((num_row_tiles * 8, 128), jnp.float32),
        grid_spec=pltpu.PrefetchScalarGridSpec(
            num_scalar_prefetch=0,
            grid=(num_row_tiles, num_v_tiles),
            in_specs=[
                # TODO(synk): on v7x, once compute/step ~ DMA/step, sweep
                # pipeline_mode=pl.Buffered(3) here (costs one extra ~4 MiB buffer).
                pl.BlockSpec((tile_n, tile_v), lambda i, v: (i, v)),  # logits (native dtype)
                pl.BlockSpec((tile_n, 1), lambda i, v: (i, 0)),       # labels tile
            ],
            out_specs=pl.BlockSpec((8, 128), lambda i, v: (i, 0)),    # per-row-tile partial block
            scratch_shapes=[
                pltpu.VMEM((tile_n, 1), jnp.float32),   # running max
                pltpu.VMEM((tile_n, 1), jnp.float32),   # running sum of exp
                pltpu.VMEM((tile_n, 1), jnp.float32),   # accumulated label logit
            ],
        ),
        compiler_params=pltpu.CompilerParams(
            dimension_semantics=("parallel", "arbitrary"),   # rows shard across cores, V is the reduction
            # double-buffered 4 MiB input + f32 temporaries stays under 48 MiB, which
            # also respects v7x's 64 MiB physical VMEM (v5e/v6e have 128 MiB).
            vmem_limit_bytes=48 * 1024 * 1024,
        ),
    )(logits, labels)

    # tiny host-side reduction of the per-tile partials
    return jnp.sum(partials[:, 0]), jnp.sum(partials[:, 1])


def _nsp_cross_entropy(logits, labels):
    """Plain-JAX CE(mean, ignore_index=-1) for the (batch, 2) next-sentence head."""
    logits = logits.astype(jnp.float32)
    labels = labels.reshape(-1).astype(jnp.int32)
    lse = jax.nn.logsumexp(logits, axis=-1)
    safe = jnp.where(labels == -1, 0, labels)
    ll = jnp.take_along_axis(logits, safe[:, None], axis=-1)[:, 0]
    valid = labels != -1
    loss = jnp.where(valid, lse - ll, 0.0)
    # TODO(synk): like PyTorch, this is NaN if every label is ignore_index (0/0).
    return jnp.sum(loss) / jnp.sum(valid.astype(jnp.float32))


class BertPretrainingCriterion:
    """JAX/Pallas port of the PyTorch BertPretrainingCriterion module."""

    def __init__(self, vocab_size):
        self.vocab_size = vocab_size
        # (no learnable parameters in this module)

    def __call__(self, prediction_scores, seq_relationship_score,
                 masked_lm_labels, next_sentence_labels):
        mlm_sum, mlm_cnt = _cross_entropy_sum_count(
            prediction_scores.reshape(-1, self.vocab_size),
            masked_lm_labels.reshape(-1),
        )
        # TODO(synk): like PyTorch, masked_lm_loss is NaN if every MLM label is -1 (0/0).
        masked_lm_loss = mlm_sum / mlm_cnt                       # mean over non-ignored rows
        next_sentence_loss = _nsp_cross_entropy(
            seq_relationship_score.reshape(-1, 2),
            next_sentence_labels.reshape(-1),
        )
        return masked_lm_loss + next_sentence_loss


def _reference_loss(prediction_scores, seq_relationship_score,
                    masked_lm_labels, next_sentence_labels, vocab_size):
    """Pure-JAX reference for validation."""
    def ce(logits, labels):
        logits = logits.astype(jnp.float32)
        labels = labels.astype(jnp.int32)
        lse = jax.nn.logsumexp(logits, axis=-1)
        safe = jnp.where(labels == -1, 0, labels)
        ll = jnp.take_along_axis(logits, safe[:, None], axis=-1)[:, 0]
        loss = jnp.where(labels == -1, 0.0, lse - ll)
        valid = (labels != -1).astype(jnp.float32)
        return jnp.sum(loss) / jnp.sum(valid)

    a = ce(prediction_scores.reshape(-1, vocab_size), masked_lm_labels.reshape(-1))
    b = ce(seq_relationship_score.reshape(-1, 2), next_sentence_labels.reshape(-1))
    return a + b


if __name__ == "__main__":
    # ---- check 1: small demo shapes, fp32, N and V divide the tiles exactly ----
    batch_size = 2
    max_len = 8
    vocab_size = 512

    key = jax.random.PRNGKey(0)
    k1, k2, k3, k4, k5 = jax.random.split(key, 5)

    prediction_scores = jax.random.normal(k1, (batch_size, max_len, vocab_size), jnp.float32)
    seq_relationship_score = jax.random.normal(k2, (batch_size, 2), jnp.float32)
    masked_lm_labels = jax.random.randint(k3, (batch_size, max_len), 0, vocab_size, dtype=jnp.int32)
    ignore_mask = jax.random.bernoulli(k4, 0.3, (batch_size, max_len))
    masked_lm_labels = jnp.where(ignore_mask, -1, masked_lm_labels)
    next_sentence_labels = jax.random.randint(k5, (batch_size,), 0, 2, dtype=jnp.int32)

    criterion = BertPretrainingCriterion(vocab_size)
    total_loss = jax.block_until_ready(
        criterion(prediction_scores, seq_relationship_score,
                  masked_lm_labels, next_sentence_labels))
    ref = _reference_loss(prediction_scores, seq_relationship_score,
                          masked_lm_labels, next_sentence_labels, vocab_size)
    np.testing.assert_allclose(np.asarray(total_loss), np.asarray(ref), rtol=1e-5, atol=1e-5)

    # ---- check 2: bf16 logits with ragged N and V (exercises the V-tiled online
    #      logsumexp, the last-tile-only tail masking, and the ragged row tail) ----
    b2, l2, v2 = 2, 13, 2176   # V > 2048 -> two vocab tiles, last one partial; N % tile_n != 0
    kk = jax.random.split(jax.random.PRNGKey(1), 4)
    ps2 = jax.random.normal(kk[0], (b2, l2, v2), jnp.float32).astype(jnp.bfloat16)
    sr2 = jax.random.normal(kk[1], (b2, 2), jnp.float32)
    lbl2 = jax.random.randint(kk[2], (b2, l2), 0, v2, dtype=jnp.int32)
    lbl2 = jnp.where(jax.random.bernoulli(kk[3], 0.3, (b2, l2)), -1, lbl2)
    nsl2 = jax.random.randint(jax.random.PRNGKey(2), (b2,), 0, 2, dtype=jnp.int32)

    crit2 = BertPretrainingCriterion(v2)
    out2 = jax.block_until_ready(crit2(ps2, sr2, lbl2, nsl2))
    ref2 = _reference_loss(ps2, sr2, lbl2, nsl2, v2)
    np.testing.assert_allclose(np.asarray(out2), np.asarray(ref2), rtol=1e-4, atol=1e-4)

    print("KERNEL_OK")
</pallas_src>

<mosaic_0001>
module attributes {stable_mosaic.version = 11 : i64} {
  func.func @_ce_kernel(%arg0: i32, %arg1: i32, %arg2: memref<16x512xf32, #tpu.memory_space<vmem>>, %arg3: memref<16x1xi32, #tpu.memory_space<vmem>>, %arg4: memref<8x128xf32, #tpu.memory_space<vmem>>, %arg5: memref<16x1xf32, #tpu.memory_space<vmem>>, %arg6: memref<16x1xf32, #tpu.memory_space<vmem>>, %arg7: memref<16x1xf32, #tpu.memory_space<vmem>>) attributes {dimension_semantics = [#tpu.dimension_semantics<parallel>, #tpu.dimension_semantics<arbitrary>], iteration_bounds = array<i64: 1, 1>, scalar_prefetch = 0 : i64, scratch_operands = 3 : i64, tpu.core_type = #tpu.core_type<tc>, window_params = [{transform_indices = @transform_0, window_bounds = array<i64: 16, 512>}, {transform_indices = @transform_1, window_bounds = array<i64: 16, 1>}, {transform_indices = @transform_2, window_bounds = array<i64: 8, 128>}]} {
    %c0_i32 = arith.constant 0 : i32
    %0 = arith.cmpi eq, %arg1, %c0_i32 : i32
    %1 = arith.extui %0 : i1 to i32
    %c0_i32_0 = arith.constant 0 : i32
    %2 = arith.cmpi ne, %1, %c0_i32_0 : i32
    scf.if %2 {
      %cst_24 = arith.constant 0xFF800000 : f32
      %45 = vector.broadcast %cst_24 : f32 to vector<16x1xf32>
      %c0_25 = arith.constant 0 : index
      %c0_26 = arith.constant 0 : index
      %46 = vector.load %arg5[%c0_25, %c0_26] : memref<16x1xf32, #tpu.memory_space<vmem>>, vector<16x1xf32>
      tpu.vector_store %arg5[%c0_25, %c0_26], %45 {strides = array<i32>} : memref<16x1xf32, #tpu.memory_space<vmem>>, vector<16x1xf32>,
      %cst_27 = arith.constant 0.000000e+00 : f32
      %47 = vector.broadcast %cst_27 : f32 to vector<16x1xf32>
      %c0_28 = arith.constant 0 : index
      %c0_29 = arith.constant 0 : index
      %48 = vector.load %arg6[%c0_28, %c0_29] : memref<16x1xf32, #tpu.memory_space<vmem>>, vector<16x1xf32>
      tpu.vector_store %arg6[%c0_28, %c0_29], %47 {strides = array<i32>} : memref<16x1xf32, #tpu.memory_space<vmem>>, vector<16x1xf32>,
      %cst_30 = arith.constant 0.000000e+00 : f32
      %49 = vector.broadcast %cst_30 : f32 to vector<16x1xf32>
      %c0_31 = arith.constant 0 : index
      %c0_32 = arith.constant 0 : index
      %50 = vector.load %arg7[%c0_31, %c0_32] : memref<16x1xf32, #tpu.memory_space<vmem>>, vector<16x1xf32>
      tpu.vector_store %arg7[%c0_31, %c0_32], %49 {strides = array<i32>} : memref<16x1xf32, #tpu.memory_space<vmem>>, vector<16x1xf32>,
    } else {
    }
    %c0 = arith.constant 0 : index
    %c0_1 = arith.constant 0 : index
    %3 = vector.load %arg3[%c0, %c0_1] : memref<16x1xi32, #tpu.memory_space<vmem>>, vector<16x1xi32>
    %4 = tpu.iota {dimensions = array<i32: 1>} : vector<16x512xi32>
    %c512_i32 = arith.constant 512 : i32
    %5 = arith.muli %arg1, %c512_i32 : i32
    %6 = vector.broadcast %5 : i32 to vector<16x1xi32>
    %7 = arith.subi %3, %6 : vector<16x1xi32>
    %c0_2 = arith.constant 0 : index
    %c0_3 = arith.constant 0 : index
    %8 = vector.load %arg2[%c0_2, %c0_3] : memref<16x512xf32, #tpu.memory_space<vmem>>, vector<16x512xf32>
    %cst = arith.constant dense<0xFF800000> : vector<16xf32>
    %9 = vector.multi_reduction <maximumf>, %8, %cst [1] : vector<16x512xf32> to vector<16xf32>
    %10 = vector.shape_cast %9 : vector<16xf32> to vector<16x1xf32>
    %c0_4 = arith.constant 0 : index
    %c0_5 = arith.constant 0 : index
    %11 = vector.load %arg5[%c0_4, %c0_5] : memref<16x1xf32, #tpu.memory_space<vmem>>, vector<16x1xf32>
    %12 = arith.maximumf %11, %10 : vector<16x1xf32>
    %13 = vector.broadcast %12 : vector<16x1xf32> to vector<16x512xf32>
    %14 = arith.subf %8, %13 : vector<16x512xf32>
    %15 = arith.subf %11, %12 : vector<16x1xf32>
    %16 = math.exp %15 : vector<16x1xf32>
    %c0_6 = arith.constant 0 : index
    %c0_7 = arith.constant 0 : index
    %17 = vector.load %arg6[%c0_6, %c0_7] : memref<16x1xf32, #tpu.memory_space<vmem>>, vector<16x1xf32>
    %18 = arith.mulf %16, %17 : vector<16x1xf32>
    %19 = math.exp %14 : vector<16x512xf32>
    %cst_8 = arith.constant dense<0.000000e+00> : vector<16xf32>
    %20 = vector.multi_reduction <add>, %19, %cst_8 [1] : vector<16x512xf32> to vector<16xf32>
    %21 = vector.shape_cast %20 : vector<16xf32> to vector<16x1xf32>
    %22 = arith.addf %18, %21 : vector<16x1xf32>
    %c0_9 = arith.constant 0 : index
    %c0_10 = arith.constant 0 : index
    %23 = vector.load %arg6[%c0_9, %c0_10] : memref<16x1xf32, #tpu.memory_space<vmem>>, vector<16x1xf32>
    tpu.vector_store %arg6[%c0_9, %c0_10], %22 {strides = array<i32>} : memref<16x1xf32, #tpu.memory_space<vmem>>, vector<16x1xf32>,
    %c0_11 = arith.constant 0 : index
    %c0_12 = arith.constant 0 : index
    %24 = vector.load %arg5[%c0_11, %c0_12] : memref<16x1xf32, #tpu.memory_space<vmem>>, vector<16x1xf32>
    tpu.vector_store %arg5[%c0_11, %c0_12], %12 {strides = array<i32>} : memref<16x1xf32, #tpu.memory_space<vmem>>, vector<16x1xf32>,
    %25 = vector.broadcast %7 : vector<16x1xi32> to vector<16x512xi32>
    %26 = arith.cmpi eq, %4, %25 : vector<16x512xi32>
    %cst_13 = arith.constant 0.000000e+00 : f32
    %27 = vector.broadcast %cst_13 : f32 to vector<16x512xf32>
    %28 = arith.select %26, %14, %27 : vector<16x512xi1>, vector<16x512xf32>
    %cst_14 = arith.constant dense<0.000000e+00> : vector<16xf32>
    %29 = vector.multi_reduction <add>, %28, %cst_14 [1] : vector<16x512xf32> to vector<16xf32>
    %30 = vector.shape_cast %29 : vector<16xf32> to vector<16x1xf32>
    %c0_i32_15 = arith.constant 0 : i32
    %31 = vector.broadcast %c0_i32_15 : i32 to vector<16x1xi32>
    %32 = arith.cmpi sge, %7, %31 : vector<16x1xi32>
    %c512_i32_16 = arith.constant 512 : i32
    %33 = vector.broadcast %c512_i32_16 : i32 to vector<16x1xi32>
    %34 = arith.cmpi slt, %7, %33 : vector<16x1xi32>
    %35 = arith.andi %32, %34 : vector<16x1xi1>
    %c0_17 = arith.constant 0 : index
    %c0_18 = arith.constant 0 : index
    %36 = vector.load %arg7[%c0_17, %c0_18] : memref<16x1xf32, #tpu.memory_space<vmem>>, vector<16x1xf32>
    %cst_19 = arith.constant 0.000000e+00 : f32
    %37 = vector.broadcast %cst_19 : f32 to vector<16x1xf32>
    %38 = arith.select %35, %12, %37 : vector<16x1xi1>, vector<16x1xf32>
    %39 = arith.addf %30, %38 : vector<16x1xf32>
    %40 = arith.addf %36, %39 : vector<16x1xf32>
    %c0_20 = arith.constant 0 : index
    %c0_21 = arith.constant 0 : index
    %41 = vector.load %arg7[%c0_20, %c0_21] : memref<16x1xf32, #tpu.memory_space<vmem>>, vector<16x1xf32>
    tpu.vector_store %arg7[%c0_20, %c0_21], %40 {strides = array<i32>} : memref<16x1xf32, #tpu.memory_space<vmem>>, vector<16x1xf32>,
    %c0_i32_22 = arith.constant 0 : i32
    %42 = arith.cmpi eq, %arg1, %c0_i32_22 : i32
    %43 = arith.extui %42 : i1 to i32
    %c0_i32_23 = arith.constant 0 : i32
    %44 = arith.cmpi ne, %43, %c0_i32_23 : i32
    scf.if %44 {
      %c0_24 = arith.constant 0 : index
      %c0_25 = arith.constant 0 : index
      %45 = vector.load %arg5[%c0_24, %c0_25] : memref<16x1xf32, #tpu.memory_space<vmem>>, vector<16x1xf32>
      %c0_26 = arith.constant 0 : index
      %c0_27 = arith.constant 0 : index
      %46 = vector.load %arg6[%c0_26, %c0_27] : memref<16x1xf32, #tpu.memory_space<vmem>>, vector<16x1xf32>
      %47 = math.log %46 : vector<16x1xf32>
      %48 = arith.addf %45, %47 : vector<16x1xf32>
      %c0_28 = arith.constant 0 : index
      %c0_29 = arith.constant 0 : index
      %49 = vector.load %arg7[%c0_28, %c0_29] : memref<16x1xf32, #tpu.memory_space<vmem>>, vector<16x1xf32>
      %50 = arith.subf %48, %49 : vector<16x1xf32>
      %c-1_i32 = arith.constant -1 : i32
      %51 = vector.broadcast %c-1_i32 : i32 to vector<16x1xi32>
      %52 = arith.cmpi ne, %3, %51 : vector<16x1xi32>
      %cst_30 = arith.constant 0.000000e+00 : f32
      %53 = vector.broadcast %cst_30 : f32 to vector<16x1xf32>
      %54 = arith.select %52, %50, %53 : vector<16x1xi1>, vector<16x1xf32>
      %55 = vector.shape_cast %54 : vector<16x1xf32> to vector<1x16x1xf32>
      %cst_31 = arith.constant dense<0.000000e+00> : vector<1xf32>
      %56 = vector.multi_reduction <add>, %55, %cst_31 [1, 2] : vector<1x16x1xf32> to vector<1xf32>
      %57 = vector.shape_cast %56 : vector<1xf32> to vector<1x1x1xf32>
      %58 = vector.extract %57[0, 0, 0] : f32 from vector<1x1x1xf32>
      %59 = arith.extui %52 : vector<16x1xi1> to vector<16x1xi32>
      %60 = arith.sitofp %59 : vector<16x1xi32> to vector<16x1xf32>
      %61 = vector.shape_cast %60 : vector<16x1xf32> to vector<1x16x1xf32>
      %cst_32 = arith.constant dense<0.000000e+00> : vector<1xf32>
      %62 = vector.multi_reduction <add>, %61, %cst_32 [1, 2] : vector<1x16x1xf32> to vector<1xf32>
      %63 = vector.shape_cast %62 : vector<1xf32> to vector<1x1x1xf32>
      %64 = vector.extract %63[0, 0, 0] : f32 from vector<1x1x1xf32>
      %65 = tpu.iota {dimensions = array<i32: 0>} : vector<8x128xi32>
      %66 = tpu.iota {dimensions = array<i32: 1>} : vector<8x128xi32>
      %c0_i32_33 = arith.constant 0 : i32
      %67 = vector.broadcast %c0_i32_33 : i32 to vector<8x128xi32>
      %68 = arith.cmpi eq, %65, %67 : vector<8x128xi32>
      %c0_i32_34 = arith.constant 0 : i32
      %69 = vector.broadcast %c0_i32_34 : i32 to vector<8x128xi32>
      %70 = arith.cmpi eq, %66, %69 : vector<8x128xi32>
      %71 = arith.andi %68, %70 : vector<8x128xi1>
      %c0_i32_35 = arith.constant 0 : i32
      %72 = vector.broadcast %c0_i32_35 : i32 to vector<8x128xi32>
      %73 = arith.cmpi eq, %65, %72 : vector<8x128xi32>
      %c1_i32 = arith.constant 1 : i32
      %74 = vector.broadcast %c1_i32 : i32 to vector<8x128xi32>
      %75 = arith.cmpi eq, %66, %74 : vector<8x128xi32>
      %76 = arith.andi %73, %75 : vector<8x128xi1>
      %cst_36 = arith.constant 0.000000e+00 : f32
      %77 = vector.broadcast %64 : f32 to vector<8x128xf32>
      %78 = vector.broadcast %cst_36 : f32 to vector<8x128xf32>
      %79 = arith.select %76, %77, %78 : vector<8x128xi1>, vector<8x128xf32>
      %80 = vector.broadcast %58 : f32 to vector<8x128xf32>
      %81 = arith.select %71, %80, %79 : vector<8x128xi1>, vector<8x128xf32>
      %c0_37 = arith.constant 0 : index
      %c0_38 = arith.constant 0 : index
      %82 = vector.load %arg4[%c0_37, %c0_38] : memref<8x128xf32, #tpu.memory_space<vmem>>, vector<8x128xf32>
      tpu.vector_store %arg4[%c0_37, %c0_38], %81 {strides = array<i32>} : memref<8x128xf32, #tpu.memory_space<vmem>>, vector<8x128xf32>,
    } else {
    }
    return
  }
  func.func @transform_0(%arg0: i32, %arg1: i32) -> (i32, i32) {
    %c0_i32 = arith.constant 0 : i32
    return %arg0, %arg1 : i32, i32
  }
  func.func @transform_1(%arg0: i32, %arg1: i32) -> (i32, i32) {
    %c0_i32 = arith.constant 0 : i32
    %c0_i32_0 = arith.constant 0 : i32
    return %arg0, %c0_i32 : i32, i32
  }
  func.func @transform_2(%arg0: i32, %arg1: i32) -> (i32, i32) {
    %c0_i32 = arith.constant 0 : i32
    %c0_i32_0 = arith.constant 0 : i32
    return %arg0, %c0_i32 : i32, i32
  }
}

</mosaic_0001>

<llo_original>
// kernel: tpu_custom_call.1
$region0: #{tpu_custom_call.1}
  #allocation0 [shape = 'u32[]', space=smem, size = 0x4, offset = 0x4, fixed_abs, tag = 'smem constant byte address 0x4 - core index']
  #allocation1 [shape = 'u32[144,128]{1,0:T(1,128)}', space=vmem, size = 0x12000, scoped, tag = 'internal scratch']
  #allocation2 [shape = 'f32[16,1]{1,0:T(8,128)}', space=vmem, size = 0x2000, scoped, tag = 'scratch operand']
  #allocation3 [shape = 'f32[16,1]{1,0:T(8,128)}', space=vmem, size = 0x2000, scoped, tag = 'scratch operand']
  #allocation4 [shape = 'f32[16,1]{1,0:T(8,128)}', space=vmem, size = 0x2000, scoped, tag = 'scratch operand']
  %s0 = inlined_call_operand.hbm [shape: f32[16,512], index: 0, kind: input, shape index: {}]
  %s1 = inlined_call_operand.vmem [shape: s32[16,1], index: 1, kind: input, shape index: {}]
  %s2 = inlined_call_operand.hbm [shape: f32[8,128], index: 2, kind: output, shape index: {}]
  %s3 = sld [smem:[#allocation0]]
  $region30: #{tpu_custom_call.1} parent=0
    _
  %s5 = ssub.s32 1, %s3
  %s6 = scalar_select 0, %s5, %s3
  $region1: #{tpu_custom_call.1} parent=0
    #allocation5 [shape = 'u8[32768]{0}', space=vmem, size = 0x8000, scoped, tag = 'input window, operand 0, single buffered']
    #allocation6 [shape = 's32[1]{0}', space=sflag, size = 0x4, scoped, tag = 'scoped memory for tpu_custom_call.1']
    #allocation7 [shape = 's32[1]{0}', space=sflag, size = 0x4, scoped, tag = 'scoped memory for tpu_custom_call.1']
    #allocation8 [shape = 'u8[4096]{0}', space=vmem, size = 0x1000, scoped, tag = 'output window, operand 0, single buffered']
    %7 = vsyncpa [#allocation6], 0
    %8 = vsyncpa [#allocation7], 0
    // Predicated region
    $region2: #{tpu_custom_call.1} parent=1 // pred_check
      _
    $region3: #{tpu_custom_call.1} parent=1 // pred_check_branch
      %10 = sbr.rel (0) target = $region5
    $region4: #{tpu_custom_call.1} parent=1 // pred_region
      %s12 = ssub.s32 1024, 1024
      %13 = vsyncadd [#allocation6], %s12
      %s14 = sshll.u32 [#allocation5], 4
      %s15 = int_to_ptr.vmem [resolvable:$true] %s14
      %20 = dma.hbm_to_vmem [thread:$0]  %s0, 1024, %s15, [#allocation6], 512, 512, 32
    $region5: #{tpu_custom_call.1} parent=1 // pred_fallthru
      _
    // Predicated region
    $region6: #{tpu_custom_call.1} parent=1 // pred_check
      _
    $region7: #{tpu_custom_call.1} parent=1 // pred_check_branch
      %22 = sbr.rel (0) target = $region9
    $region8: #{tpu_custom_call.1} parent=1 // pred_region
      _
    $region9: #{tpu_custom_call.1} parent=1 // pred_fallthru
      _
    // Predicated region
    $region10: #{tpu_custom_call.1} parent=1 // pred_check
      _
    $region11: #{tpu_custom_call.1} parent=1 // pred_check_branch
      %24 = sbr.rel (0) target = $region13
    $region12: #{tpu_custom_call.1} parent=1 // pred_region
      %25 = dma.done [#allocation6], 1024
    $region13: #{tpu_custom_call.1} parent=1 // pred_fallthru
      _
    %p26 = scmp.eq.s32.totalorder 0, 0
    // Predicated region
    $region14: #{tpu_custom_call.1} parent=1 // pred_check
      %p27 = pneg %p26
    $region15: #{tpu_custom_call.1} parent=1 // pred_check_branch
      %29 = sbr.rel (%p27) target = $region17
    $region16: #{tpu_custom_call.1} parent=1 // pred_region
      %vm30 = vcmask 7168
      %31 = vst.msk [vmem:[#allocation2] sm:$0xff] %vm30, -inf
      %32 = vst.msk [vmem:[#allocation2 + $0x8] sm:$0xff] %vm30, -inf
      %33 = vst.msk [vmem:[#allocation3] sm:$0xff] %vm30, 0.0
      %34 = vst.msk [vmem:[#allocation3 + $0x8] sm:$0xff] %vm30, 0.0
      %35 = vst.msk [vmem:[#allocation4] sm:$0xff] %vm30, 0.0
      %36 = vst.msk [vmem:[#allocation4 + $0x8] sm:$0xff] %vm30, 0.0
    $region17: #{tpu_custom_call.1} parent=1 // pred_fallthru
      _
    %v37 = vld [vmem:[%s1] sm:$0xff]
    %v38 = vld [vmem:[%s1 + $0x8] sm:$0xff]
    %v39 = vlaneseq
    %v40 = vand.u32 %v39, 127
    %v41 = vadd.s32 %v40, 128
    %v42 = vadd.s32 %v40, 256
    %v43 = vadd.s32 %v40, 384
    %s44 = smul.u32 0, 512
    %v45 = vstv %s44
    %v46 = vsub.s32 %v37, %v45
    %v47 = vsub.s32 %v38, %v45
    %v48 = vld [vmem:[#allocation5] sm:$0xff]
    %v49 = vld [vmem:[#allocation5 + $0x8] sm:$0xff]
    %v50 = vld [vmem:[#allocation5 + $0x10] sm:$0xff]
    %v51 = vld [vmem:[#allocation5 + $0x18] sm:$0xff]
    %v52 = vld [vmem:[#allocation5 + $0x20] sm:$0xff]
    %v53 = vld [vmem:[#allocation5 + $0x28] sm:$0xff]
    %v54 = vld [vmem:[#allocation5 + $0x30] sm:$0xff]
    %v55 = vld [vmem:[#allocation5 + $0x38] sm:$0xff]
    %v56 = vmax.f32 %v48, %v50
    %v57 = vmax.f32 %v49, %v51
    %v58 = vmax.f32 %v56, %v57
    %59 = vmax.xlane.f32.xlu0 %v58
    %v60 = vpop.xlane.xlu0 %59
    %v61 = vmax.f32 %v52, %v54
    %v62 = vmax.f32 %v53, %v55
    %v63 = vmax.f32 %v61, %v62
    %64 = vmax.xlane.f32.xlu0 %v63
    %v65 = vpop.xlane.xlu0 %64
    %v66 = vld [vmem:[#allocation2] sm:$0xff]
    %v67 = vld [vmem:[#allocation2 + $0x8] sm:$0xff]
    %v68 = vmax.f32 %v66, %v60
    %v69 = vmax.f32 %v67, %v65
    %71 = vset.pattern.permute.xlu0 0
    %72 = vperm.xlu0 %71, %v68
    %v73 = vpop.permute.xlu0 %72
    %76 = vset.pattern.permute.xlu0 0
    %77 = vperm.xlu0 %76, %v69
    %v78 = vpop.permute.xlu0 %77
    %v80 = vsub.f32 %v48, %v73
    %v81 = vsub.f32 %v49, %v73
    %v82 = vsub.f32 %v50, %v73
    %v83 = vsub.f32 %v51, %v73
    %v84 = vsub.f32 %v52, %v78
    %v85 = vsub.f32 %v53, %v78
    %v86 = vsub.f32 %v54, %v78
    %v87 = vsub.f32 %v55, %v78
    %v88 = vsub.f32 %v66, %v68
    %v89 = vsub.f32 %v67, %v69
    %v90 = vmul.f32 %v88, 1.442695
    %v91 = vpow.pop %v90
    %v92 = vmul.f32 %v89, 1.442695
    %v93 = vpow.pop %v92
    %v94 = vld [vmem:[#allocation3] sm:$0xff]
    %v95 = vld [vmem:[#allocation3 + $0x8] sm:$0xff]
    %v96 = vmul.f32 %v91, %v94
    %v97 = vmul.f32 %v93, %v95
    %v98 = vmul.f32 %v80, 1.442695
    %v99 = vpow.pop %v98
    %v100 = vmul.f32 %v81, 1.442695
    %v101 = vpow.pop %v100
    %v102 = vmul.f32 %v82, 1.442695
    %v103 = vpow.pop %v102
    %v104 = vmul.f32 %v83, 1.442695
    %v105 = vpow.pop %v104
    %v106 = vmul.f32 %v84, 1.442695
    %v107 = vpow.pop %v106
    %v108 = vmul.f32 %v85, 1.442695
    %v109 = vpow.pop %v108
    %v110 = vmul.f32 %v86, 1.442695
    %v111 = vpow.pop %v110
    %v112 = vmul.f32 %v87, 1.442695
    %v113 = vpow.pop %v112
    %v114 = vadd.f32 %v99, %v101
    %v115 = vadd.f32 %v114, %v103
    %v116 = vadd.f32 %v115, %v105
    %117 = vadd.xlane.f32.xlu0 %v116
    %v118 = vpop.xlane.xlu0 %117
    %v119 = vadd.f32 %v107, %v109
    %v120 = vadd.f32 %v119, %v111
    %v121 = vadd.f32 %v120, %v113
    %122 = vadd.xlane.f32.xlu0 %v121
    %v123 = vpop.xlane.xlu0 %122
    %v124 = vadd.f32 %v96, %v118
    %v125 = vadd.f32 %v97, %v123
    %vm126 = vcmask 7168
    %127 = vst.msk [vmem:[#allocation3] sm:$0xff] %vm126, %v124
    %128 = vst.msk [vmem:[#allocation3 + $0x8] sm:$0xff] %vm126, %v125
    %129 = vst.msk [vmem:[#allocation2] sm:$0xff] %vm126, %v68
    %130 = vst.msk [vmem:[#allocation2 + $0x8] sm:$0xff] %vm126, %v69
    %131 = vset.pattern.permute.xlu0 0
    %132 = vperm.xlu0 %131, %v46
    %v133 = vpop.permute.xlu0 %132
    %134 = vset.pattern.permute.xlu0 0
    %135 = vperm.xlu0 %134, %v47
    %v136 = vpop.permute.xlu0 %135
    %vm137 = vcmp.eq.s32.totalorder %v40, %v133
    %vm138 = vcmp.eq.s32.totalorder %v41, %v133
    %vm139 = vcmp.eq.s32.totalorder %v42, %v133
    %vm140 = vcmp.eq.s32.totalorder %v43, %v133
    %vm141 = vcmp.eq.s32.totalorder %v40, %v136
    %vm142 = vcmp.eq.s32.totalorder %v41, %v136
    %vm143 = vcmp.eq.s32.totalorder %v42, %v136
    %vm144 = vcmp.eq.s32.totalorder %v43, %v136
    %v145 = vsel %vm137, %v80, 0.0
    %v146 = vsel %vm138, %v81, 0.0
    %v147 = vsel %vm139, %v82, 0.0
    %v148 = vsel %vm140, %v83, 0.0
    %v149 = vsel %vm141, %v84, 0.0
    %v150 = vsel %vm142, %v85, 0.0
    %v151 = vsel %vm143, %v86, 0.0
    %v152 = vsel %vm144, %v87, 0.0
    %v153 = vadd.f32 %v145, %v146
    %v154 = vadd.f32 %v153, %v147
    %v155 = vadd.f32 %v154, %v148
    %156 = vadd.xlane.f32.xlu0 %v155
    %v157 = vpop.xlane.xlu0 %156
    %v158 = vadd.f32 %v149, %v150
    %v159 = vadd.f32 %v158, %v151
    %v160 = vadd.f32 %v159, %v152
    %161 = vadd.xlane.f32.xlu0 %v160
    %v162 = vpop.xlane.xlu0 %161
    %vm163 = vcmp.ge.s32.totalorder %v46, 0
    %vm164 = vcmp.ge.s32.totalorder %v47, 0
    %vm165 = vcmp.lt.s32.totalorder %v46, 512
    %vm166 = vcmp.lt.s32.totalorder %v47, 512
    %vm167 = vmand %vm163, %vm165
    %vm168 = vmand %vm164, %vm166
    %v169 = vld [vmem:[#allocation4] sm:$0xff]
    %v170 = vld [vmem:[#allocation4 + $0x8] sm:$0xff]
    %v171 = vsel %vm167, %v68, 0.0
    %v172 = vsel %vm168, %v69, 0.0
    %v173 = vadd.f32 %v157, %v171
    %v174 = vadd.f32 %v162, %v172
    %v175 = vadd.f32 %v169, %v173
    %v176 = vadd.f32 %v170, %v174
    %177 = vst.msk [vmem:[#allocation4] sm:$0xff] %vm126, %v175
    %178 = vst.msk [vmem:[#allocation4 + $0x8] sm:$0xff] %vm126, %v176
    // Predicated region
    $region18: #{tpu_custom_call.1} parent=1 // pred_check
      %p179 = pneg %p26
    $region19: #{tpu_custom_call.1} parent=1 // pred_check_branch
      %181 = sbr.rel (%p179) target = $region21
    $region20: #{tpu_custom_call.1} parent=1 // pred_region
      %v182 = vld [vmem:[#allocation2] sm:$0xff]
      %v183 = vld [vmem:[#allocation2 + $0x8] sm:$0xff]
      %v184 = vld [vmem:[#allocation3] sm:$0xff]
      %v185 = vld [vmem:[#allocation3 + $0x8] sm:$0xff]
      %v186 = vlog2.pop %v184
      %v187 = vmul.f32 %v186, 0.6931472
      %v188 = vlog2.pop %v185
      %v189 = vmul.f32 %v188, 0.6931472
      %v190 = vadd.f32 %v182, %v187
      %v191 = vadd.f32 %v183, %v189
      %v192 = vld [vmem:[#allocation4] sm:$0xff]
      %v193 = vld [vmem:[#allocation4 + $0x8] sm:$0xff]
      %v194 = vsub.f32 %v190, %v192
      %v195 = vsub.f32 %v191, %v193
      %vm196 = vcmp.ne.s32.totalorder %v37, 4294967295
      %vm197 = vcmp.ne.s32.totalorder %v38, 4294967295
      %v198 = vsel %vm196, %v194, 0.0
      %v199 = vsel %vm197, %v195, 0.0
      %v200 = vsel %vm126, %v198, 0.0
      %v201 = vsel %vm126, %v199, 0.0
      %v202 = vadd.f32 %v200, %v201
      %203 = vadd.xlane.f32.xlu0 %v202
      %v204 = vpop.xlane.xlu0 %203
      %v205 = vrot.slane %v204, 4
      %v206 = vadd.f32 %v204, %v205
      %v207 = vrot.slane %v206, 2
      %v208 = vadd.f32 %v206, %v207
      %v209 = vrot.slane %v208, 1
      %v210 = vadd.f32 %v208, %v209
      %s211 = vtos %v210
      %v212 = vsel %vm196, 1, 0
      %v213 = vsel %vm197, 1, 0
      %v214 = vcvt.s32.f32 %v212
      %v215 = vcvt.s32.f32 %v213
      %v216 = vsel %vm126, %v214, 0.0
      %v217 = vsel %vm126, %v215, 0.0
      %v218 = vadd.f32 %v216, %v217
      %219 = vadd.xlane.f32.xlu0 %v218
      %v220 = vpop.xlane.xlu0 %219
      %v221 = vrot.slane %v220, 4
      %v222 = vadd.f32 %v220, %v221
      %v223 = vrot.slane %v222, 2
      %v224 = vadd.f32 %v222, %v223
      %v225 = vrot.slane %v224, 1
      %v226 = vadd.f32 %v224, %v225
      %s227 = vtos %v226
      %v228 = vlaneseq
      %v229 = vshrl.u32 %v228, 7
      %vm230 = vcmp.eq.s32.totalorder %v229, 0
      %vm231 = vcmp.eq.s32.totalorder %v40, 0
      %vm232 = vmand %vm230, %vm231
      %vm233 = vcmp.eq.s32.totalorder %v40, 1
      %vm234 = vmand %vm230, %vm233
      %v235 = vstv %s227
      %v236 = vsel %vm234, %v235, 0.0
      %v237 = vstv %s211
      %v238 = vsel %vm232, %v237, %v236
      %239 = vst [vmem:[#allocation8] sm:$0xff] %v238
    $region21: #{tpu_custom_call.1} parent=1 // pred_fallthru
      _
    // Predicated region
    $region22: #{tpu_custom_call.1} parent=1 // pred_check
      _
    $region23: #{tpu_custom_call.1} parent=1 // pred_check_branch
      %241 = sbr.rel (0) target = $region25
    $region24: #{tpu_custom_call.1} parent=1 // pred_region
      %s243 = ssub.s32 128, 128
      %244 = vsyncadd [#allocation7], %s243
      %s246 = sshll.u32 [#allocation8], 4
      %s247 = int_to_ptr.vmem [resolvable:$true] %s246
      %249 = dma.vmem_to_hbm [thread:$0]  %s247, 128, %s2, [#allocation7]
    $region25: #{tpu_custom_call.1} parent=1 // pred_fallthru
      _
    // Predicated region
    $region26: #{tpu_custom_call.1} parent=1 // pred_check
      _
    $region27: #{tpu_custom_call.1} parent=1 // pred_check_branch
      %251 = sbr.rel (0) target = $region29
    $region28: #{tpu_custom_call.1} parent=1 // pred_region
      %252 = dma.done [#allocation7], 128
    $region29: #{tpu_custom_call.1} parent=1 // pred_fallthru
      _
    %253 = vsyncpa [#allocation6], 1
    %254 = vsyncpa [#allocation7], 1

</llo_original>
